<compile_context>
chip_gen: v7x
topology: tpu7x:2x2x1
jax: 0.10.0
libtpu: 0.0.40
codegen_flags: <defaults>
</compile_context>

<pallas_src>
import functools

import jax
import jax.numpy as jnp
from jax.experimental import pallas as pl
from jax.experimental.pallas import tpu as pltpu


def _round_up(x, m):
    return ((x + m - 1) // m) * m


def aecf_kernel(r_ref, wt_ref, b_ref, y_ref, o_ref, x_ref, *,
                yt_resident, approx_sigmoid):
    # r_ref : (tb, num_items)        current batch tile, full item dim
    # wt_ref: (num_items, H)         full encoder weight W^T, grid-invariant
    # b_ref : (1, H) f32             encoder bias, grid-invariant
    # y_ref : (nj, H, tn) resident | (1, H, tn) streamed   Y^T column tiles
    # o_ref : (tb, tn)               output tile
    # x_ref : (tb, H) compute_dtype  VMEM scratch: hoisted encoder activations
    j = pl.program_id(1)

    # Encoder matmul + bias + ReLU: computed ONCE per batch tile (j == 0),
    # carried in scratch across the (innermost, "arbitrary") j axis.
    @pl.when(j == 0)
    def _():
        x = jnp.dot(r_ref[...], wt_ref[...], preferred_element_type=jnp.float32)
        x_ref[...] = jnp.maximum(x + b_ref[...], 0.0).astype(x_ref.dtype)

    # Decoder: logits for this output-item tile, then sigmoid.
    y_tile = y_ref[j] if yt_resident else y_ref[0]          # (H, tn)
    logits = jnp.dot(x_ref[...], y_tile, preferred_element_type=jnp.float32)
    if approx_sigmoid:
        # exp + reciprocal both go to the EUP slot; frees VALU/vst slots.
        o = pl.reciprocal(1.0 + jnp.exp(-logits), approx=True)
    else:
        o = jax.nn.sigmoid(logits)
    o_ref[...] = o.astype(o_ref.dtype)


def aecf_forward(r_i, w_enc, b_enc, Y, *, tb=None, tn=None,
                 compute_dtype=jnp.bfloat16, out_dtype=None,
                 yt_resident=None, approx_sigmoid=True):
    """AECF forward.

    r_i:   (B, num_items)   interaction rows
    w_enc: (H, num_items)   nn.Linear weight
    b_enc: (H,)             nn.Linear bias
    Y:     (num_items, H)   item embedding buffer
    """
    B, num_items = r_i.shape
    H = w_enc.shape[0]
    assert w_enc.shape == (H, num_items) and Y.shape == (num_items, H)
    # Default output dtype follows the compute dtype (bf16 on the fast path):
    # the output write is the largest single HBM stream on this memory-bound
    # kernel, so f32 output should be an explicit opt-in.
    out_dtype = compute_dtype if out_dtype is None else out_dtype

    # --- batch tile ---------------------------------------------------------
    if tb is None:
        tb = 256 if B >= 256 else 128          # fill the 256-wide MXU when possible
    tb = _round_up(max(8, min(tb, _round_up(B, 8))), 8)
    # Megacore: make sure the "parallel" batch axis has >= 2 tiles when the
    # batch allows it, so v7x's 2 TensorCores both get work.
    if B > 8 and _round_up(B, tb) // tb < 2:
        tb = max(8, _round_up((B + 1) // 2, 8))
    Bp = _round_up(B, tb)

    # --- output-item tile (always lane-dense: multiple of 128) --------------
    Np = _round_up(num_items, 128)             # pad items instead of odd tiles
    tn = 512 if tn is None else tn
    tn = _round_up(min(tn, Np), 128)
    while Np % tn:                             # Np is a multiple of 128 -> terminates
        tn -= 128
    nj = Np // tn

    # --- operand prep (bf16 MXU operands, f32 bias / accumulation) ----------
    isz = jnp.dtype(compute_dtype).itemsize
    osz = jnp.dtype(out_dtype).itemsize

    r = r_i.astype(compute_dtype)
    if Bp != B:
        r = jnp.pad(r, ((0, Bp - B), (0, 0)))
    w_t = w_enc.T.astype(compute_dtype)                       # (num_items, H)
    b2 = b_enc.reshape(1, H).astype(jnp.float32)              # (1, H)
    y_pad = Y if Np == num_items else jnp.pad(Y, ((0, Np - num_items), (0, 0)))
    # (nj, H, tn): per-output-tile slabs of Y^T; leading axis indexed in-kernel
    # so the whole stack can sit resident in VMEM with a constant block index.
    y3 = y_pad.astype(compute_dtype).reshape(nj, tn, H).transpose(0, 2, 1)

    # --- VMEM plan: resident vs streamed Y^T, clamped limit ------------------
    try:
        vmem_capacity = int(pltpu.get_tpu_info().vmem_capacity_bytes)
    except Exception:
        vmem_capacity = 64 * 1024 * 1024       # conservative: v7x per-TC budget

    def plan_bytes(resident):
        return (2 * tb * num_items * isz                     # r tile (2 bufs)
                + 2 * num_items * H * isz                    # W^T (grid-invariant)
                + 2 * 8 * max(H, 128) * 4                    # bias (padded, f32)
                + 2 * H * (Np if resident else tn) * isz     # Y^T
                + 2 * tb * tn * osz                          # output tile
                + tb * H * isz)                              # x scratch

    budget = int(vmem_capacity * 0.8)
    if yt_resident is None:
        yt_resident = plan_bytes(True) <= budget
    est = plan_bytes(yt_resident)
    vmem_limit = min(vmem_capacity - (2 << 20), max(32 << 20, int(est * 1.25)))

    if yt_resident:
        y_spec = pl.BlockSpec((nj, H, tn), lambda i, j: (0, 0, 0))
    else:
        y_spec = pl.BlockSpec((1, H, tn), lambda i, j: (j, 0, 0))

    cost = pl.CostEstimate(
        flops=int(4 * B * num_items * H),
        transcendentals=int(2 * B * num_items),
        bytes_accessed=int(B * num_items * isz + 2 * num_items * H * isz
                           + H * 4 + B * num_items * osz),
    )

    kernel = functools.partial(aecf_kernel, yt_resident=bool(yt_resident),
                               approx_sigmoid=bool(approx_sigmoid))

    out = pl.pallas_call(
        kernel,
        out_shape=jax.ShapeDtypeStruct((Bp, Np), out_dtype),
        grid_spec=pltpu.PrefetchScalarGridSpec(
            num_scalar_prefetch=0,
            grid=(Bp // tb, nj),
            in_specs=[
                pl.BlockSpec((tb, num_items), lambda i, j: (i, 0)),   # r tile
                pl.BlockSpec((num_items, H), lambda i, j: (0, 0)),    # W^T (full)
                pl.BlockSpec((1, H), lambda i, j: (0, 0)),            # bias
                y_spec,                                               # Y^T tiles
            ],
            out_specs=pl.BlockSpec((tb, tn), lambda i, j: (i, j)),
            scratch_shapes=[pltpu.VMEM((tb, H), compute_dtype)],
        ),
        compiler_params=pltpu.CompilerParams(
            # batch axis parallel (megacore sharding); j axis is "arbitrary"
            # because the hoisted-encoder scratch is carried across it.
            dimension_semantics=("parallel", "arbitrary"),
            vmem_limit_bytes=int(vmem_limit),
        ),
        cost_estimate=cost,
    )(r, w_t, b2, y3)

    if Bp != B or Np != num_items:
        out = out[:B, :num_items]
    return out


def aecf_reference(r_i, w_enc, b_enc, Y):
    x = jnp.maximum(r_i @ w_enc.T + b_enc, 0.0)
    return jax.nn.sigmoid(x @ Y.T)


if __name__ == "__main__":
    # Small, tile-friendly shapes consistent with the module:
    B, num_items, hidden_dim = 16, 256, 128

    key = jax.random.PRNGKey(0)
    k_r, k_w, k_b, k_y, k_r2, k_w2, k_y2 = jax.random.split(key, 7)

    r_i = jax.random.uniform(k_r, (B, num_items), dtype=jnp.float32)
    w_enc = jax.random.normal(k_w, (hidden_dim, num_items), dtype=jnp.float32) * 0.05
    b_enc = jax.random.normal(k_b, (hidden_dim,), dtype=jnp.float32) * 0.05
    Y = jax.random.normal(k_y, (num_items, hidden_dim), dtype=jnp.float32) * 0.05
    # TODO(synk): nn.LSTM from __init__ is never used in forward(); not implemented.

    ref = aecf_reference(r_i, w_enc, b_enc, Y)

    # 1) f32 exact path, small tiles: exercises the (i, j) grid, the hoisted
    #    encoder scratch carry, and the dynamic index into the RESIDENT Y^T
    #    stack (nj = 2).  Tight check vs the f32 reference.
    out_f32 = aecf_forward(r_i, w_enc, b_enc, Y, tb=8, tn=128,
                           compute_dtype=jnp.float32, approx_sigmoid=False)
    out_f32 = jax.block_until_ready(out_f32)
    assert out_f32.shape == (B, num_items)
    assert jnp.allclose(out_f32, ref, atol=1e-5, rtol=1e-5)

    # 2) f32 exact path with the STREAMED Y^T fallback forced.
    out_str = aecf_forward(r_i, w_enc, b_enc, Y, tb=8, tn=128,
                           compute_dtype=jnp.float32, approx_sigmoid=False,
                           yt_resident=False)
    out_str = jax.block_until_ready(out_str)
    assert jnp.allclose(out_str, ref, atol=1e-5, rtol=1e-5)

    # 3) default (performance) path: bf16 MXU operands + bf16 output, f32
    #    accumulation, resident Y^T, approx EUP sigmoid.  Looser tolerance.
    out_bf16 = aecf_forward(r_i, w_enc, b_enc, Y)
    out_bf16 = jax.block_until_ready(out_bf16)
    assert out_bf16.shape == (B, num_items)
    assert jnp.allclose(out_bf16.astype(jnp.float32), ref, atol=2e-2, rtol=2e-2)

    # 4) non-128-divisible catalog: num_items = 200 is padded to 256 so the
    #    output tile stays lane-dense; padded columns are sliced off.
    ni2 = 200
    r2 = jax.random.uniform(k_r2, (B, ni2), dtype=jnp.float32)
    w2 = jax.random.normal(k_w2, (hidden_dim, ni2), dtype=jnp.float32) * 0.05
    Y2 = jax.random.normal(k_y2, (ni2, hidden_dim), dtype=jnp.float32) * 0.05
    ref2 = aecf_reference(r2, w_enc=w2, b_enc=b_enc, Y=Y2)
    out2 = jax.block_until_ready(aecf_forward(r2, w2, b_enc, Y2))
    assert out2.shape == (B, ni2)
    assert jnp.allclose(out2.astype(jnp.float32), ref2, atol=2e-2, rtol=2e-2)

    print("KERNEL_OK")
</pallas_src>

<mosaic_0001>
module attributes {stable_mosaic.version = 11 : i64} {
  func.func @aecf_kernel(%arg0: i32, %arg1: i32, %arg2: memref<8x256xf32, #tpu.memory_space<vmem>>, %arg3: memref<256x128xf32, #tpu.memory_space<vmem>>, %arg4: memref<1x128xf32, #tpu.memory_space<vmem>>, %arg5: memref<2x128x128xf32, #tpu.memory_space<vmem>>, %arg6: memref<8x128xf32, #tpu.memory_space<vmem>>, %arg7: memref<8x128xf32, #tpu.memory_space<vmem>>) attributes {dimension_semantics = [#tpu.dimension_semantics<parallel>, #tpu.dimension_semantics<arbitrary>], iteration_bounds = array<i64: 2, 2>, scalar_prefetch = 0 : i64, scratch_operands = 1 : i64, tpu.core_type = #tpu.core_type<tc>, window_params = [{transform_indices = @transform_0, window_bounds = array<i64: 8, 256>}, {pipeline_mode = #tpu.pipeline_mode<synchronous>, transform_indices = @transform_1, window_bounds = array<i64: 256, 128>}, {pipeline_mode = #tpu.pipeline_mode<synchronous>, transform_indices = @transform_2, window_bounds = array<i64: 1, 128>}, {pipeline_mode = #tpu.pipeline_mode<synchronous>, transform_indices = @transform_3, window_bounds = array<i64: 2, 128, 128>}, {transform_indices = @transform_4, window_bounds = array<i64: 8, 128>}]} {
    %c0_i32 = arith.constant 0 : i32
    %0 = arith.cmpi eq, %arg1, %c0_i32 : i32
    %1 = arith.extui %0 : i1 to i32
    %c0_i32_0 = arith.constant 0 : i32
    %2 = arith.cmpi ne, %1, %c0_i32_0 : i32
    scf.if %2 {
      %c0_7 = arith.constant 0 : index
      %c0_8 = arith.constant 0 : index
      %14 = vector.load %arg2[%c0_7, %c0_8] : memref<8x256xf32, #tpu.memory_space<vmem>>, vector<8x256xf32>
      %c0_9 = arith.constant 0 : index
      %c0_10 = arith.constant 0 : index
      %15 = vector.load %arg3[%c0_9, %c0_10] : memref<256x128xf32, #tpu.memory_space<vmem>>, vector<256x128xf32>
      %cst_11 = arith.constant dense<0.000000e+00> : vector<8x128xf32>
      %16 = tpu.matmul %14, %15, %cst_11 {dimension_numbers = #tpu.dot_dimension_numbers<[1], [0], [0], [1], [0, 0, 1, 1], [], []>} : vector<8x256xf32>, vector<256x128xf32>, vector<8x128xf32> -> vector<8x128xf32>
      %c0_12 = arith.constant 0 : index
      %c0_13 = arith.constant 0 : index
      %17 = vector.load %arg4[%c0_12, %c0_13] : memref<1x128xf32, #tpu.memory_space<vmem>>, vector<1x128xf32>
      %18 = vector.broadcast %17 : vector<1x128xf32> to vector<8x128xf32>
      %19 = arith.addf %16, %18 : vector<8x128xf32>
      %cst_14 = arith.constant 0.000000e+00 : f32
      %20 = vector.broadcast %cst_14 : f32 to vector<8x128xf32>
      %21 = arith.maximumf %19, %20 : vector<8x128xf32>
      %c0_15 = arith.constant 0 : index
      %c0_16 = arith.constant 0 : index
      %22 = vector.load %arg7[%c0_15, %c0_16] : memref<8x128xf32, #tpu.memory_space<vmem>>, vector<8x128xf32>
      tpu.vector_store %arg7[%c0_15, %c0_16], %21 {strides = array<i32>} : memref<8x128xf32, #tpu.memory_space<vmem>>, vector<8x128xf32>,
    } else {
    }
    %3 = arith.index_cast %arg1 : i32 to index
    %c0 = arith.constant 0 : index
    %c0_1 = arith.constant 0 : index
    %4 = vector.load %arg5[%3, %c0, %c0_1] : memref<2x128x128xf32, #tpu.memory_space<vmem>>, vector<1x128x128xf32>
    %5 = vector.shape_cast %4 : vector<1x128x128xf32> to vector<128x128xf32>
    %c0_2 = arith.constant 0 : index
    %c0_3 = arith.constant 0 : index
    %6 = vector.load %arg7[%c0_2, %c0_3] : memref<8x128xf32, #tpu.memory_space<vmem>>, vector<8x128xf32>
    %cst = arith.constant dense<0.000000e+00> : vector<8x128xf32>
    %7 = tpu.matmul %6, %5, %cst {dimension_numbers = #tpu.dot_dimension_numbers<[1], [0], [0], [1], [0, 0, 1, 1], [], []>} : vector<8x128xf32>, vector<128x128xf32>, vector<8x128xf32> -> vector<8x128xf32>
    %8 = arith.negf %7 : vector<8x128xf32>
    %9 = math.exp %8 : vector<8x128xf32>
    %cst_4 = arith.constant 1.000000e+00 : f32
    %10 = vector.broadcast %cst_4 : f32 to vector<8x128xf32>
    %11 = arith.addf %10, %9 : vector<8x128xf32>
    %12 = arith.divf %10, %11 : vector<8x128xf32>
    %c0_5 = arith.constant 0 : index
    %c0_6 = arith.constant 0 : index
    %13 = vector.load %arg6[%c0_5, %c0_6] : memref<8x128xf32, #tpu.memory_space<vmem>>, vector<8x128xf32>
    tpu.vector_store %arg6[%c0_5, %c0_6], %12 {strides = array<i32>} : memref<8x128xf32, #tpu.memory_space<vmem>>, vector<8x128xf32>,
    return
  }
  func.func @transform_0(%arg0: i32, %arg1: i32) -> (i32, i32) {
    %c0_i32 = arith.constant 0 : i32
    %c0_i32_0 = arith.constant 0 : i32
    return %arg0, %c0_i32 : i32, i32
  }
  func.func @transform_1(%arg0: i32, %arg1: i32) -> (i32, i32) {
    %c0_i32 = arith.constant 0 : i32
    %c0_i32_0 = arith.constant 0 : i32
    %c0_i32_1 = arith.constant 0 : i32
    return %c0_i32, %c0_i32_0 : i32, i32
  }
  func.func @transform_2(%arg0: i32, %arg1: i32) -> (i32, i32) {
    %c0_i32 = arith.constant 0 : i32
    %c0_i32_0 = arith.constant 0 : i32
    %c0_i32_1 = arith.constant 0 : i32
    return %c0_i32, %c0_i32_0 : i32, i32
  }
  func.func @transform_3(%arg0: i32, %arg1: i32) -> (i32, i32, i32) {
    %c0_i32 = arith.constant 0 : i32
    %c0_i32_0 = arith.constant 0 : i32
    %c0_i32_1 = arith.constant 0 : i32
    %c0_i32_2 = arith.constant 0 : i32
    return %c0_i32, %c0_i32_0, %c0_i32_1 : i32, i32, i32
  }
  func.func @transform_4(%arg0: i32, %arg1: i32) -> (i32, i32) {
    %c0_i32 = arith.constant 0 : i32
    return %arg0, %arg1 : i32, i32
  }
}

</mosaic_0001>

<llo_original>
// kernel: tpu_custom_call.1
$region0: #{tpu_custom_call.1}
  #allocation0 [shape = 'u32[]', space=smem, size = 0x4, offset = 0x4, fixed_abs, tag = 'smem constant byte address 0x4 - core index']
  #allocation1 [shape = 'u32[144,128]{1,0:T(1,128)}', space=vmem, size = 0x12000, scoped, tag = 'internal scratch']
  #allocation2 [shape = 'f32[8,128]{1,0:T(8,128)}', space=vmem, size = 0x1000, scoped, tag = 'scratch operand']
  %s0 = inlined_call_operand.hbm [shape: f32[16,256], index: 0, kind: input, shape index: {}]
  %s1 = inlined_call_operand.hbm [shape: f32[256,128], index: 1, kind: input, shape index: {}]
  %s2 = inlined_call_operand.vmem [shape: f32[1,128], index: 2, kind: input, shape index: {}]
  %s3 = inlined_call_operand.hbm [shape: f32[2,128,128], index: 3, kind: input, shape index: {}]
  %s4 = inlined_call_operand.hbm [shape: f32[16,256], index: 4, kind: output, shape index: {}]
  %s5 = sld [smem:[#allocation0]]
  $region65: #{tpu_custom_call.1} parent=0
    _
  %s7 = ssub.s32 1, %s5
  %s8 = scalar_select 0, %s7, %s5
  $region1: #{tpu_custom_call.1} parent=0
    #allocation3 [shape = 'u8[16384]{0}', space=vmem, size = 0x4000, scoped, tag = 'input window, operand 0']
    #allocation4 [shape = 's32[2]{0}', space=sflag, size = 0x8, scoped, tag = 'scoped memory for tpu_custom_call.1']
    #allocation5 [shape = 's32[2]{0}', space=sflag, size = 0x8, scoped, tag = 'scoped memory for tpu_custom_call.1']
    #allocation6 [shape = 'u8[131072]{0}', space=vmem, size = 0x20000, scoped, tag = 'input window, operand 1, single buffered']
    #allocation7 [shape = 's32[1]{0}', space=sflag, size = 0x4, scoped, tag = 'scoped memory for tpu_custom_call.1']
    #allocation8 [shape = 'u8[131072]{0}', space=vmem, size = 0x20000, scoped, tag = 'input window, operand 3, single buffered']
    #allocation9 [shape = 'u8[8192]{0}', space=vmem, size = 0x2000, scoped, tag = 'output window, operand 0']
    %9 = vsyncpa [#allocation4], 0
    %s10 = scalar_lea.sflag [#allocation4], 1
    %11 = vsyncpa %s10, 0
    %12 = vsyncpa [#allocation7], 0
    %13 = vsyncpa [#allocation5], 0
    %s14 = scalar_lea.sflag [#allocation5], 1
    %15 = vsyncpa %s14, 0
    loop: start=0, step=1, limit=6
    $region2: #{tpu_custom_call.1} parent=1 // loop_pre_header
      _
    $region3: #{tpu_custom_call.1} parent=1 // loop_header
      %s17 = sphi 0, %s21
      %p18 = scmp.ge.s32.totalorder %s17, 6
      %s24 = sphi 0, %s36
      %s25 = sphi 0, %s32
      %s26 = sphi 0, %s24
      %s27 = sphi 0, %s25
      %s28 = sphi 0, %s26
      %s29 = sphi 0, %s27
      %s39 = sphi 0, %s41
      %s42 = sphi 0, %s39
      %s43 = sphi 0, %s42
      %s59 = sphi 0, %s43
      %s63 = sphi 0, %s63
      %s65 = sphi 0, %s63
      %s66 = sphi 0, %s65
      %s80 = sphi 0, %s66
      %s84 = sphi 0, %s84
      %s86 = sphi 0, %s84
      %s87 = sphi 0, %s86
      %s101 = sphi 0, %s87
      %s105 = sphi 0, %s105
      %s107 = sphi 0, %s105
      %s108 = sphi 0, %s107
      %s122 = sphi 0, %s108
      %s130 = sphi 0, %s132
      %s133 = sphi 0, %s130
      %s134 = sphi 0, %s133
      %s150 = sphi 0, %s134
    $region4: #{tpu_custom_call.1} parent=1 // loop_header_branch
      %20 = sbr.rel (%p18) target = $region8
    $region5: #{tpu_custom_call.1} parent=1 // loop_body
      %s22 = ssub.s32 %s17, 1
      %s23 = ssub.s32 %s17, 2
      %s30 = sadd.s32 1, %s25
      %p31 = scmp.ge.s32.totalorder %s30, 2
      %s32 = scalar_select %p31, 0, %s30
      %s33 = sadd.s32 1, %s24
      %s34 = scalar_select %p31, %s33, %s24
      %p35 = scmp.ge.s32.totalorder %s34, 2
      %s36 = scalar_select %p35, 0, %s34
      %s37 = ssub.s32 %s24, %s36
      %p38 = scmp.eq.s32.totalorder %s37, 0
      %s40 = sadd.s32 %s39, 1
      %s41 = scalar_select %p38, %s39, %s40
      %p44 = pneg %p38
      %p45 = scmp.eq.s32.totalorder %s17, 3
      %p46 = por %p44, %p45
      %p47 = scmp.ne.s32.totalorder %s39, %s42
      %p48 = scmp.eq.s32.totalorder %s17, 0
      %p49 = por %p47, %p48
      %p50 = scmp.ne.s32.totalorder %s39, %s42
      %p51 = scmp.eq.s32.totalorder %s22, 3
      %p52 = por %p50, %p51
      %p53 = scmp.ne.s32.totalorder %s42, %s43
      %p54 = scmp.eq.s32.totalorder %s22, 0
      %p55 = por %p53, %p54
      %p56 = scmp.ne.s32.totalorder %s42, %s43
      %p57 = scmp.eq.s32.totalorder %s23, 3
      %p58 = por %p56, %p57
      %p60 = scmp.ne.s32.totalorder %s43, %s59
      %p61 = scmp.eq.s32.totalorder %s23, 0
      %p62 = por %p60, %p61
      %s64 = sadd.s32 %s63, 1
      %p67 = scmp.eq.s32.totalorder %s17, 3
      %p68 = scmp.ne.s32.totalorder %s63, %s65
      %p69 = scmp.eq.s32.totalorder %s17, 0
      %p70 = por %p68, %p69
      %p71 = scmp.ne.s32.totalorder %s63, %s65
      %p72 = scmp.eq.s32.totalorder %s22, 3
      %p73 = por %p71, %p72
      %p74 = scmp.ne.s32.totalorder %s65, %s66
      %p75 = scmp.eq.s32.totalorder %s22, 0
      %p76 = por %p74, %p75
      %p77 = scmp.ne.s32.totalorder %s65, %s66
      %p78 = scmp.eq.s32.totalorder %s23, 3
      %p79 = por %p77, %p78
      %p81 = scmp.ne.s32.totalorder %s66, %s80
      %p82 = scmp.eq.s32.totalorder %s23, 0
      %p83 = por %p81, %p82
      %s85 = sadd.s32 %s84, 1
      %p88 = scmp.eq.s32.totalorder %s17, 3
      %p89 = scmp.ne.s32.totalorder %s84, %s86
      %p90 = scmp.eq.s32.totalorder %s17, 0
      %p91 = por %p89, %p90
      %p92 = scmp.ne.s32.totalorder %s84, %s86
      %p93 = scmp.eq.s32.totalorder %s22, 3
      %p94 = por %p92, %p93
      %p95 = scmp.ne.s32.totalorder %s86, %s87
      %p96 = scmp.eq.s32.totalorder %s22, 0
      %p97 = por %p95, %p96
      %p98 = scmp.ne.s32.totalorder %s86, %s87
      %p99 = scmp.eq.s32.totalorder %s23, 3
      %p100 = por %p98, %p99
      %p102 = scmp.ne.s32.totalorder %s87, %s101
      %p103 = scmp.eq.s32.totalorder %s23, 0
      %p104 = por %p102, %p103
      %s106 = sadd.s32 %s105, 1
      %p109 = scmp.eq.s32.totalorder %s17, 3
      %p110 = scmp.ne.s32.totalorder %s105, %s107
      %p111 = scmp.eq.s32.totalorder %s17, 0
      %p112 = por %p110, %p111
      %p113 = scmp.ne.s32.totalorder %s105, %s107
      %p114 = scmp.eq.s32.totalorder %s22, 3
      %p115 = por %p113, %p114
      %p116 = scmp.ne.s32.totalorder %s107, %s108
      %p117 = scmp.eq.s32.totalorder %s22, 0
      %p118 = por %p116, %p117
      %p119 = scmp.ne.s32.totalorder %s107, %s108
      %p120 = scmp.eq.s32.totalorder %s23, 3
      %p121 = por %p119, %p120
      %p123 = scmp.ne.s32.totalorder %s108, %s122
      %p124 = scmp.eq.s32.totalorder %s23, 0
      %p125 = por %p123, %p124
      %s126 = ssub.s32 %s24, %s36
      %s127 = ssub.s32 %s25, %s32
      %s128 = sor.u32 %s126, %s127
      %p129 = scmp.eq.s32.totalorder %s128, 0
      %s131 = sadd.s32 %s130, 1
      %s132 = scalar_select %p129, %s130, %s131
      %p135 = pneg %p129
      %p136 = scmp.eq.s32.totalorder %s17, 3
      %p137 = por %p135, %p136
      %p138 = scmp.ne.s32.totalorder %s130, %s133
      %p139 = scmp.eq.s32.totalorder %s17, 0
      %p140 = por %p138, %p139
      %p141 = scmp.ne.s32.totalorder %s130, %s133
      %p142 = scmp.eq.s32.totalorder %s22, 3
      %p143 = por %p141, %p142
      %p144 = scmp.ne.s32.totalorder %s133, %s134
      %p145 = scmp.eq.s32.totalorder %s22, 0
      %p146 = por %p144, %p145
      %p147 = scmp.ne.s32.totalorder %s133, %s134
      %p148 = scmp.eq.s32.totalorder %s23, 3
      %p149 = por %p147, %p148
      %p151 = scmp.ne.s32.totalorder %s134, %s150
      %p152 = scmp.eq.s32.totalorder %s23, 0
      %p153 = por %p151, %p152
      %p154 = scmp.le.s32.totalorder 1, %s17
      %p155 = scmp.lt.s32.totalorder %s17, 5
      %p156 = pnand %p154, %p155
      %p157 = pneg %p156
      // Predicated region
      $region9: #{tpu_custom_call.1} parent=5 // pred_check
        _
      $region10: #{tpu_custom_call.1} parent=5 // pred_check_branch
        %159 = sbr.rel (%p156) target = $region12
      $region11: #{tpu_custom_call.1} parent=5 // pred_region
        %s160 = ssub.s32 %s17, 1
        // Predicated region
        $region13: #{tpu_custom_call.1} parent=11 // pred_check
          %p161 = pneg %p76
        $region14: #{tpu_custom_call.1} parent=11 // pred_check_branch
          %163 = sbr.rel (%p161) target = $region16
        $region15: #{tpu_custom_call.1} parent=11 // pred_region
          %s165 = ssub.s32 4096, 4096
          %166 = vsyncadd [#allocation7], %s165
          %s167 = sshll.u32 [#allocation6], 4
          %s168 = int_to_ptr.vmem [resolvable:$true] %s167
          %173 = dma.hbm_to_vmem [thread:$0]  %s1, 4096, %s168, [#allocation7], 128, 128, 8
        $region16: #{tpu_custom_call.1} parent=11 // pred_fallthru
          _
        // Predicated region
        $region17: #{tpu_custom_call.1} parent=11 // pred_check
          %p174 = pneg %p97
        $region18: #{tpu_custom_call.1} parent=11 // pred_check_branch
          %176 = sbr.rel (%p174) target = $region20
        $region19: #{tpu_custom_call.1} parent=11 // pred_region
          _
        $region20: #{tpu_custom_call.1} parent=11 // pred_fallthru
          _
        // Predicated region
        $region21: #{tpu_custom_call.1} parent=11 // pred_check
          %p177 = pneg %p118
        $region22: #{tpu_custom_call.1} parent=11 // pred_check_branch
          %179 = sbr.rel (%p177) target = $region24
        $region23: #{tpu_custom_call.1} parent=11 // pred_region
          %s181 = ssub.s32 4096, 4096
          %182 = vsyncadd [#allocation7], %s181
          %s183 = sshll.u32 [#allocation8], 4
          %s184 = int_to_ptr.vmem [resolvable:$true] %s183
          %189 = dma.hbm_to_vmem [thread:$0]  %s3, 4096, %s184, [#allocation7], 128, 128, 8
        $region24: #{tpu_custom_call.1} parent=11 // pred_fallthru
          _
      $region12: #{tpu_custom_call.1} parent=5 // pred_fallthru
        _
      %p190 = scmp.lt.s32.totalorder %s17, 4
      // Predicated region
      $region25: #{tpu_custom_call.1} parent=5 // pred_check
        %p191 = pneg %p190
      $region26: #{tpu_custom_call.1} parent=5 // pred_check_branch
        %193 = sbr.rel (%p191) target = $region28
      $region27: #{tpu_custom_call.1} parent=5 // pred_region
        // Predicated region
        $region29: #{tpu_custom_call.1} parent=27 // pred_check
          %p194 = pneg %p49
        $region30: #{tpu_custom_call.1} parent=27 // pred_check_branch
          %196 = sbr.rel (%p194) target = $region32
        $region31: #{tpu_custom_call.1} parent=27 // pred_region
          %s197 = sand.u32 %s39, 1
          %s198 = scalar_lea.sflag [#allocation4], %s197
          %s199 = sand.u32 %s39, 1
          %s200 = smul.addr %s199, 16
          %s201 = scalar_lea.vmem [#allocation3], %s200
          %s203 = ssub.s32 256, 256
          %204 = vsyncadd %s198, %s203
          %s205 = smul.addr %s24, 2
          %s206 = smul.addr %s205, 128
          %s207 = scalar_lea.hbm %s0, %s206
          %s209 = sshll.u32 %s201, 4
          %s210 = int_to_ptr.vmem [resolvable:$true] %s209
          %212 = dma.hbm_to_vmem [thread:$0]  %s207, 256, %s210, %s198
        $region32: #{tpu_custom_call.1} parent=27 // pred_fallthru
          _
      $region28: #{tpu_custom_call.1} parent=5 // pred_fallthru
        _
      %p213 = scmp.le.s32.totalorder 1, %s17
      %p214 = scmp.lt.s32.totalorder %s17, 5
      %p215 = pnand %p213, %p214
      %p216 = pneg %p215
      // Predicated region
      $region33: #{tpu_custom_call.1} parent=5 // pred_check
        _
      $region34: #{tpu_custom_call.1} parent=5 // pred_check_branch
        %218 = sbr.rel (%p215) target = $region36
      $region35: #{tpu_custom_call.1} parent=5 // pred_region
        %s219 = ssub.s32 %s17, 1
        %s220 = sand.u32 %s42, 1
        %s221 = scalar_lea.sflag [#allocation4], %s220
        %s222 = sand.u32 %s42, 1
        %s223 = smul.addr %s222, 16
        %s224 = scalar_lea.vmem [#allocation3], %s223
        // Predicated region
        $region37: #{tpu_custom_call.1} parent=35 // pred_check
          %p225 = pneg %p55
        $region38: #{tpu_custom_call.1} parent=35 // pred_check_branch
          %227 = sbr.rel (%p225) target = $region40
        $region39: #{tpu_custom_call.1} parent=35 // pred_region
          %228 = dma.done %s221, 256
        $region40: #{tpu_custom_call.1} parent=35 // pred_fallthru
          _
        // Predicated region
        $region41: #{tpu_custom_call.1} parent=35 // pred_check
          %p229 = pneg %p76
        $region42: #{tpu_custom_call.1} parent=35 // pred_check_branch
          %231 = sbr.rel (%p229) target = $region44
        $region43: #{tpu_custom_call.1} parent=35 // pred_region
          %232 = dma.done [#allocation7], 4096
        $region44: #{tpu_custom_call.1} parent=35 // pred_fallthru
          _
        // Predicated region
        $region45: #{tpu_custom_call.1} parent=35 // pred_check
          %p233 = pneg %p118
        $region46: #{tpu_custom_call.1} parent=35 // pred_check_branch
          %235 = sbr.rel (%p233) target = $region48
        $region47: #{tpu_custom_call.1} parent=35 // pred_region
          %236 = dma.done [#allocation7], 4096
        $region48: #{tpu_custom_call.1} parent=35 // pred_fallthru
          _
        %s237 = sand.u32 %s42, 1
        %s238 = scalar_lea.sflag [#allocation4], %s237
        %s239 = sand.u32 %s42, 1
        %s240 = smul.addr %s239, 16
        %s241 = scalar_lea.vmem [#allocation3], %s240
        %p242 = pneg %p55
        %p243 = pneg %p52
        %p244 = pneg %p76
        %p245 = pneg %p73
        %p246 = pneg %p97
        %p247 = pneg %p94
        %p248 = pneg %p118
        %p249 = pneg %p115
        %p250 = pneg %p146
        %p251 = pneg %p143
        %s252 = sand.u32 %s133, 1
        %s253 = scalar_lea.sflag [#allocation5], %s252
        %s254 = sand.u32 %s133, 1
        %s255 = smul.addr %s254, 8
        %s256 = scalar_lea.vmem [#allocation9], %s255
        %p257 = scmp.eq.s32.totalorder %s27, 0
        // Predicated region
        $region49: #{tpu_custom_call.1} parent=35 // pred_check
          %p258 = pneg %p257
        $region50: #{tpu_custom_call.1} parent=35 // pred_check_branch
          %260 = sbr.rel (%p258) target = $region52
        $region51: #{tpu_custom_call.1} parent=35 // pred_region
          %v261 = vld [vmem:[%s224] sm:$0xff]
          %v262 = vld [vmem:[%s224 + $0x8] sm:$0xff]
          %v263 = vld [vmem:[#allocation6] sm:$0xff]
          %v264 = vld [vmem:[#allocation6 + $0x8] sm:$0xff]
          %v265 = vld [vmem:[#allocation6 + $0x10] sm:$0xff]
          %v266 = vld [vmem:[#allocation6 + $0x18] sm:$0xff]
          %v267 = vld [vmem:[#allocation6 + $0x20] sm:$0xff]
          %v268 = vld [vmem:[#allocation6 + $0x28] sm:$0xff]
          %v269 = vld [vmem:[#allocation6 + $0x30] sm:$0xff]
          %v270 = vld [vmem:[#allocation6 + $0x38] sm:$0xff]
          %v271 = vld [vmem:[#allocation6 + $0x40] sm:$0xff]
          %v272 = vld [vmem:[#allocation6 + $0x48] sm:$0xff]
          %v273 = vld [vmem:[#allocation6 + $0x50] sm:$0xff]
          %v274 = vld [vmem:[#allocation6 + $0x58] sm:$0xff]
          %v275 = vld [vmem:[#allocation6 + $0x60] sm:$0xff]
          %v276 = vld [vmem:[#allocation6 + $0x68] sm:$0xff]
          %v277 = vld [vmem:[#allocation6 + $0x70] sm:$0xff]
          %v278 = vld [vmem:[#allocation6 + $0x78] sm:$0xff]
          %v279 = vld [vmem:[#allocation6 + $0x80] sm:$0xff]
          %v280 = vld [vmem:[#allocation6 + $0x88] sm:$0xff]
          %v281 = vld [vmem:[#allocation6 + $0x90] sm:$0xff]
          %v282 = vld [vmem:[#allocation6 + $0x98] sm:$0xff]
          %v283 = vld [vmem:[#allocation6 + $0xa0] sm:$0xff]
          %v284 = vld [vmem:[#allocation6 + $0xa8] sm:$0xff]
          %v285 = vld [vmem:[#allocation6 + $0xb0] sm:$0xff]
          %v286 = vld [vmem:[#allocation6 + $0xb8] sm:$0xff]
          %v287 = vld [vmem:[#allocation6 + $0xc0] sm:$0xff]
          %v288 = vld [vmem:[#allocation6 + $0xc8] sm:$0xff]
          %v289 = vld [vmem:[#allocation6 + $0xd0] sm:$0xff]
          %v290 = vld [vmem:[#allocation6 + $0xd8] sm:$0xff]
          %v291 = vld [vmem:[#allocation6 + $0xe0] sm:$0xff]
          %v292 = vld [vmem:[#allocation6 + $0xe8] sm:$0xff]
          %v293 = vld [vmem:[#allocation6 + $0xf0] sm:$0xff]
          %v294 = vld [vmem:[#allocation6 + $0xf8] sm:$0xff]
          %v295 = vld [vmem:[%s2] sm:$0x1]
          %v297 = vlaneseq
          %v298 = vshrl.u32 %v297, 7
          %v299 = vsub.s32 0, %v298
          %v300 = vrot.slane %v295, %v299
          %302 = vmatprep.subr.mxu0 0.0
          %303 = vmatpush1.msra.mxu0 %v263
          %304 = vmatprep.subr.mxu0 0.0
          %305 = vmatpush1.msra.mxu0 %v264
          %306 = vmatprep.subr.mxu0 0.0
          %307 = vmatpush1.msra.mxu0 %v265
          %308 = vmatprep.subr.mxu0 0.0
          %309 = vmatpush1.msra.mxu0 %v266
          %310 = vmatprep.subr.mxu0 0.0
          %311 = vmatpush1.msra.mxu0 %v267
          %312 = vmatprep.subr.mxu0 0.0
          %313 = vmatpush1.msra.mxu0 %v268
          %314 = vmatprep.subr.mxu0 0.0
          %315 = vmatpush1.msra.mxu0 %v269
          %316 = vmatprep.subr.mxu0 0.0
          %317 = vmatpush1.msra.mxu0 %v270
          %318 = vmatprep.subr.mxu0 0.0
          %319 = vmatpush1.msra.mxu0 %v271
          %320 = vmatprep.subr.mxu0 0.0
          %321 = vmatpush1.msra.mxu0 %v272
          %322 = vmatprep.subr.mxu0 0.0
          %323 = vmatpush1.msra.mxu0 %v273
          %324 = vmatprep.subr.mxu0 0.0
          %325 = vmatpush1.msra.mxu0 %v274
          %326 = vmatprep.subr.mxu0 0.0
          %327 = vmatpush1.msra.mxu0 %v275
          %328 = vmatprep.subr.mxu0 0.0
          %329 = vmatpush1.msra.mxu0 %v276
          %330 = vmatprep.subr.mxu0 0.0
          %331 = vmatpush1.msra.mxu0 %v277
          %332 = vmatprep.subr.mxu0 0.0
          %333 = vmatpush1.msra.mxu0 %v278
          %334 = vmatprep.subr.mxu0 0.0
          %335 = vmatpush1.msra.mxu0 %v279
          %336 = vmatprep.subr.mxu0 0.0
          %337 = vmatpush1.msra.mxu0 %v280
          %338 = vmatprep.subr.mxu0 0.0
          %339 = vmatpush1.msra.mxu0 %v281
          %340 = vmatprep.subr.mxu0 0.0
          %341 = vmatpush1.msra.mxu0 %v282
          %342 = vmatprep.subr.mxu0 0.0
          %343 = vmatpush1.msra.mxu0 %v283
          %344 = vmatprep.subr.mxu0 0.0
          %345 = vmatpush1.msra.mxu0 %v284
          %346 = vmatprep.subr.mxu0 0.0
          %347 = vmatpush1.msra.mxu0 %v285
          %348 = vmatprep.subr.mxu0 0.0
          %349 = vmatpush1.msra.mxu0 %v286
          %350 = vmatprep.subr.mxu0 0.0
          %351 = vmatpush1.msra.mxu0 %v287
          %352 = vmatprep.subr.mxu0 0.0
          %353 = vmatpush1.msra.mxu0 %v288
          %354 = vmatprep.subr.mxu0 0.0
          %355 = vmatpush1.msra.mxu0 %v289
          %356 = vmatprep.subr.mxu0 0.0
          %357 = vmatpush1.msra.mxu0 %v290
          %358 = vmatprep.subr.mxu0 0.0
          %359 = vmatpush1.msra.mxu0 %v291
          %360 = vmatprep.subr.mxu0 0.0
          %361 = vmatpush1.msra.mxu0 %v292
          %362 = vmatprep.subr.mxu0 0.0
          %363 = vmatpush1.msra.mxu0 %v293
          %364 = vmatprep.subr.mxu0 0.0
          %365 = vmatpush1.msra.mxu0 %v294
          %366 = vmatprep.mubr.f32.mxu0 %v262
          %367 = vmatmul.mubr.f32.gmra.mrb[0].mxu0 %v261
          %v368 = vpop.f32.mrb[0].mxu0
          %v369 = vadd.f32 %v300, %v368
          %v370 = vpop.f32.mrb[0].mxu0
          %371 = vdwg.mxu0
          %v372 = vmax.f32 %v369, 0.0
          %373 = vst [vmem:[#allocation2] sm:$0xff] %v372
        $region52: #{tpu_custom_call.1} parent=35 // pred_fallthru
          _
        %s374 = smul.u32 %s27, 128
        %s375 = scalar_lea.vmem [#allocation8], %s374
        %v376 = vld [vmem:[%s375] sm:$0xff]
        %v377 = vld [vmem:[%s375 + $0x8] sm:$0xff]
        %v378 = vld [vmem:[%s375 + $0x10] sm:$0xff]
        %v379 = vld [vmem:[%s375 + $0x18] sm:$0xff]
        %v380 = vld [vmem:[%s375 + $0x20] sm:$0xff]
        %v381 = vld [vmem:[%s375 + $0x28] sm:$0xff]
        %v382 = vld [vmem:[%s375 + $0x30] sm:$0xff]
        %v383 = vld [vmem:[%s375 + $0x38] sm:$0xff]
        %v384 = vld [vmem:[%s375 + $0x40] sm:$0xff]
        %v385 = vld [vmem:[%s375 + $0x48] sm:$0xff]
        %v386 = vld [vmem:[%s375 + $0x50] sm:$0xff]
        %v387 = vld [vmem:[%s375 + $0x58] sm:$0xff]
        %v388 = vld [vmem:[%s375 + $0x60] sm:$0xff]
        %v389 = vld [vmem:[%s375 + $0x68] sm:$0xff]
        %v390 = vld [vmem:[%s375 + $0x70] sm:$0xff]
        %v391 = vld [vmem:[%s375 + $0x78] sm:$0xff]
        %v392 = vld [vmem:[#allocation2] sm:$0xff]
        %393 = vmatprep.subr.mxu0 0.0
        %394 = vmatpush1.msra.mxu0 %v376
        %395 = vmatprep.subr.mxu0 0.0
        %396 = vmatpush1.msra.mxu0 %v377
        %397 = vmatprep.subr.mxu0 0.0
        %398 = vmatpush1.msra.mxu0 %v378
        %399 = vmatprep.subr.mxu0 0.0
        %400 = vmatpush1.msra.mxu0 %v379
        %401 = vmatprep.subr.mxu0 0.0
        %402 = vmatpush1.msra.mxu0 %v380
        %403 = vmatprep.subr.mxu0 0.0
        %404 = vmatpush1.msra.mxu0 %v381
        %405 = vmatprep.subr.mxu0 0.0
        %406 = vmatpush1.msra.mxu0 %v382
        %407 = vmatprep.subr.mxu0 0.0
        %408 = vmatpush1.msra.mxu0 %v383
        %409 = vmatprep.subr.mxu0 0.0
        %410 = vmatpush1.msra.mxu0 %v384
        %411 = vmatprep.subr.mxu0 0.0
        %412 = vmatpush1.msra.mxu0 %v385
        %413 = vmatprep.subr.mxu0 0.0
        %414 = vmatpush1.msra.mxu0 %v386
        %415 = vmatprep.subr.mxu0 0.0
        %416 = vmatpush1.msra.mxu0 %v387
        %417 = vmatprep.subr.mxu0 0.0
        %418 = vmatpush1.msra.mxu0 %v388
        %419 = vmatprep.subr.mxu0 0.0
        %420 = vmatpush1.msra.mxu0 %v389
        %421 = vmatprep.subr.mxu0 0.0
        %422 = vmatpush1.msra.mxu0 %v390
        %423 = vmatprep.subr.mxu0 0.0
        %424 = vmatpush1.msra.mxu0 %v391
        %425 = vmatprep.subr.mxu0 0.0
        %426 = vmatpush1.msra.mxu0 0.0
        %427 = vmatprep.subr.mxu0 0.0
        %428 = vmatpush1.msra.mxu0 0.0
        %429 = vmatprep.subr.mxu0 0.0
        %430 = vmatpush1.msra.mxu0 0.0
        %431 = vmatprep.subr.mxu0 0.0
        %432 = vmatpush1.msra.mxu0 0.0
        %433 = vmatprep.subr.mxu0 0.0
        %434 = vmatpush1.msra.mxu0 0.0
        %435 = vmatprep.subr.mxu0 0.0
        %436 = vmatpush1.msra.mxu0 0.0
        %437 = vmatprep.subr.mxu0 0.0
        %438 = vmatpush1.msra.mxu0 0.0
        %439 = vmatprep.subr.mxu0 0.0
        %440 = vmatpush1.msra.mxu0 0.0
        %441 = vmatprep.subr.mxu0 0.0
        %442 = vmatpush1.msra.mxu0 0.0
        %443 = vmatprep.subr.mxu0 0.0
        %444 = vmatpush1.msra.mxu0 0.0
        %445 = vmatprep.subr.mxu0 0.0
        %446 = vmatpush1.msra.mxu0 0.0
        %447 = vmatprep.subr.mxu0 0.0
        %448 = vmatpush1.msra.mxu0 0.0
        %449 = vmatprep.subr.mxu0 0.0
        %450 = vmatpush1.msra.mxu0 0.0
        %451 = vmatprep.subr.mxu0 0.0
        %452 = vmatpush1.msra.mxu0 0.0
        %453 = vmatprep.subr.mxu0 0.0
        %454 = vmatpush1.msra.mxu0 0.0
        %455 = vmatprep.subr.mxu0 0.0
        %456 = vmatpush1.msra.mxu0 0.0
        %457 = vmatprep.mubr.f32.mxu0 0.0
        %458 = vmatmul.mubr.f32.gmra.mrb[0].mxu0 %v392
        %v459 = vpop.f32.mrb[0].mxu0
        %v460 = vadd.f32 0.0, %v459
        %v461 = vpop.f32.mrb[0].mxu0
        %462 = vdwg.mxu0
        %v463 = vxor.u32 %v460, 2147483648
        %v464 = vmul.f32 %v463, 1.442695
        %v465 = vpow.pop %v464
        %v466 = vadd.f32 %v465, 1.0
        %v467 = vrcp.pop %v466
        %v468 = vmul.f32 1.0, %v467
        %469 = vst [vmem:[%s256] sm:$0xff] %v468
        %s470 = sand.u32 %s133, 1
        %s471 = scalar_lea.sflag [#allocation5], %s470
        %s472 = sand.u32 %s133, 1
        %s473 = smul.addr %s472, 8
        %s474 = scalar_lea.vmem [#allocation9], %s473
        // Predicated region
        $region53: #{tpu_custom_call.1} parent=35 // pred_check
          %p475 = pneg %p143
        $region54: #{tpu_custom_call.1} parent=35 // pred_check_branch
          %477 = sbr.rel (%p475) target = $region56
        $region55: #{tpu_custom_call.1} parent=35 // pred_region
          %s479 = ssub.s32 128, 128
          %480 = vsyncadd %s471, %s479
          %s481 = smul.addr %s26, 2
          %s482 = sadd.s32 %s27, %s481
          %s483 = smul.addr %s482, 128
          %s484 = scalar_lea.hbm %s4, %s483
          %s486 = sshll.u32 %s474, 4
          %s487 = int_to_ptr.vmem [resolvable:$true] %s486
          %489 = dma.vmem_to_hbm [thread:$0]  %s487, 128, %s484, %s471
        $region56: #{tpu_custom_call.1} parent=35 // pred_fallthru
          _
      $region36: #{tpu_custom_call.1} parent=5 // pred_fallthru
        _
      %p490 = scmp.le.s32.totalorder 2, %s17
      // Predicated region
      $region57: #{tpu_custom_call.1} parent=5 // pred_check
        %p491 = pneg %p490
      $region58: #{tpu_custom_call.1} parent=5 // pred_check_branch
        %493 = sbr.rel (%p491) target = $region60
      $region59: #{tpu_custom_call.1} parent=5 // pred_region
        %s494 = ssub.s32 %s17, 2
        // Predicated region
        $region61: #{tpu_custom_call.1} parent=59 // pred_check
          %p495 = pneg %p149
        $region62: #{tpu_custom_call.1} parent=59 // pred_check_branch
          %497 = sbr.rel (%p495) target = $region64
        $region63: #{tpu_custom_call.1} parent=59 // pred_region
          %s498 = sand.u32 %s134, 1
          %s499 = scalar_lea.sflag [#allocation5], %s498
          %s500 = sand.u32 %s134, 1
          %s501 = smul.addr %s500, 8
          %s502 = scalar_lea.vmem [#allocation9], %s501
          %503 = dma.done %s499, 128
        $region64: #{tpu_custom_call.1} parent=59 // pred_fallthru
          _
      $region60: #{tpu_custom_call.1} parent=5 // pred_fallthru
        _
    $region6: #{tpu_custom_call.1} parent=1 // loop_footer
      %s21 = sadd.s32 1, %s17
    $region7: #{tpu_custom_call.1} parent=1 // loop_footer_branch
      %16 = sbr.rel target = $region3
    $region8: #{tpu_custom_call.1} parent=1 // loop_exit
      _
    %504 = vsyncpa [#allocation4], 1
    %s505 = scalar_lea.sflag [#allocation4], 1
    %506 = vsyncpa %s505, 1
    %507 = vsyncpa [#allocation7], 1
    %508 = vsyncpa [#allocation5], 1
    %s509 = scalar_lea.sflag [#allocation5], 1
    %510 = vsyncpa %s509, 1

</llo_original>
